<compile_context>
chip_gen: v6e
topology: v6e:2x2x1
jax: 0.10.0
libtpu: 0.0.40
codegen_flags: <defaults>
</compile_context>

<pallas_src>
import jax
import jax.numpy as jnp
from jax.experimental import pallas as pl
from jax.experimental.pallas import tpu as pltpu

Z_DIM = 100
H1 = 128
H2 = 256
MAX_TB = 512  # batch tile: 256-512 keeps per-step overhead amortized w/o spill blowup


def _round_up(n, m):
    return ((n + m - 1) // m) * m


def _generator_kernel(x_ref, z_ref, w1x_ref, w1z_ref, b1_ref,
                      w2_ref, b2_ref, w3_ref, b3_ref, o_ref):
    # Layer 1: Linear(input_dim + z_dim -> 128) + ReLU, concat fused as 2 dots.
    h1 = jnp.dot(x_ref[...], w1x_ref[...], preferred_element_type=jnp.float32)
    h1 = h1 + jnp.dot(z_ref[...], w1z_ref[...],
                      preferred_element_type=jnp.float32)
    h1 = jnp.maximum(h1 + b1_ref[...], 0.0)
    # Layer 2: Linear(128 -> 256) + ReLU (bf16 MXU operands, f32 accumulate).
    h2 = jnp.dot(h1.astype(jnp.bfloat16), w2_ref[...],
                 preferred_element_type=jnp.float32)
    h2 = jnp.maximum(h2 + b2_ref[...], 0.0)
    # Layer 3: Linear(256 -> out_pad) + Tanh (lane-dense padded output).
    h3 = jnp.dot(h2.astype(jnp.bfloat16), w3_ref[...],
                 preferred_element_type=jnp.float32)
    o_ref[...] = jnp.tanh(h3 + b3_ref[...]).astype(o_ref.dtype)


def generator_forward(x, z, params):
    """x: (B, input_dim), z: (B, z_dim) -> (B, output_dim)."""
    w1, b1, w2, b2, w3, b3 = params
    B, input_dim = x.shape
    _, z_dim = z.shape
    out_dim = w3.shape[1]

    # bf16 matmul operands (MXU-native), f32 bias/elementwise inside kernel.
    x_bf = x.astype(jnp.bfloat16)
    z_bf = z.astype(jnp.bfloat16)
    w1x = w1[:input_dim].astype(jnp.bfloat16)          # (input_dim, H1)
    w1z = w1[input_dim:].astype(jnp.bfloat16)          # (z_dim, H1)
    w2_bf = w2.astype(jnp.bfloat16)
    # Pad output features to a lane-dense multiple of 128.
    out_pad = _round_up(out_dim, 128)
    w3_bf = jnp.pad(w3, ((0, 0), (0, out_pad - out_dim))).astype(jnp.bfloat16)
    b3_p = jnp.pad(b3, (0, out_pad - out_dim))

    # Biases as (1, N) f32 rows (broadcast inside the kernel).
    b1r = b1.reshape(1, -1).astype(jnp.float32)
    b2r = b2.reshape(1, -1).astype(jnp.float32)
    b3r = b3_p.reshape(1, -1).astype(jnp.float32)

    # Batch tiling: pad B to a multiple of 8, tile with TB <= MAX_TB.
    Bp = _round_up(B, 8)
    TB = min(MAX_TB, Bp)
    Bp = _round_up(Bp, TB)
    if Bp != B:
        x_bf = jnp.pad(x_bf, ((0, Bp - B), (0, 0)))
        z_bf = jnp.pad(z_bf, ((0, Bp - B), (0, 0)))

    grid = (Bp // TB,)
    tiled = lambda shape: pl.BlockSpec(shape, lambda i: (i, 0))   # batch-tiled
    resident = lambda shape: pl.BlockSpec(shape, lambda i: (0, 0))  # VMEM-resident

    out = pl.pallas_call(
        _generator_kernel,
        out_shape=jax.ShapeDtypeStruct((Bp, out_pad), jnp.float32),
        grid=grid,
        in_specs=[
            tiled((TB, input_dim)),           # x
            tiled((TB, z_dim)),               # z
            resident((input_dim, H1)),        # w1x
            resident((z_dim, H1)),            # w1z
            resident((1, H1)),                # b1
            resident((H1, H2)),               # w2
            resident((1, H2)),                # b2
            resident((H2, out_pad)),          # w3 (padded)
            resident((1, out_pad)),           # b3 (padded)
        ],
        out_specs=tiled((TB, out_pad)),
        compiler_params=pltpu.CompilerParams(
            dimension_semantics=("parallel",)),
    )(x_bf, z_bf, w1x, w1z, b1r, w2_bf, b2r, w3_bf, b3r)

    return out[:B, :out_dim]


def init_params(key, input_dim, z_dim, output_dim):
    """Deterministic PyTorch-Linear-style init (uniform +-1/sqrt(fan_in)),
    weights stored as (in, out)."""
    d0 = input_dim + z_dim
    dims = [(d0, H1), (H1, H2), (H2, output_dim)]
    params = []
    for (fan_in, fan_out) in dims:
        key, kw, kb = jax.random.split(key, 3)
        bound = 1.0 / jnp.sqrt(float(fan_in))
        w = jax.random.uniform(kw, (fan_in, fan_out), jnp.float32,
                               minval=-bound, maxval=bound)
        b = jax.random.uniform(kb, (fan_out,), jnp.float32,
                               minval=-bound, maxval=bound)
        params += [w, b]
    return tuple(params)


def generator_reference(x, z, params):
    """Pure-JAX f32 reference for correctness check."""
    w1, b1, w2, b2, w3, b3 = params
    h = jnp.concatenate([x, z], axis=1)
    h = jnp.maximum(h @ w1 + b1, 0.0)
    h = jnp.maximum(h @ w2 + b2, 0.0)
    return jnp.tanh(h @ w3 + b3)


if __name__ == "__main__":
    key = jax.random.PRNGKey(0)
    batch = 8
    input_dim = 28          # input_dim + z_dim = 128
    output_dim = 64

    k_p, k_x, k_z = jax.random.split(key, 3)
    params = init_params(k_p, input_dim, Z_DIM, output_dim)
    x = jax.random.normal(k_x, (batch, input_dim), jnp.float32)
    z = jax.random.normal(k_z, (batch, Z_DIM), jnp.float32)

    out = generator_forward(x, z, params)
    out = jax.block_until_ready(out)

    ref = generator_reference(x, z, params)
    assert out.shape == (batch, output_dim)
    # bf16 matmul operands with f32 accumulation -> loosened tolerance vs f32 ref.
    assert jnp.allclose(out, ref, atol=5e-2, rtol=5e-2), "mismatch vs reference"

    print("KERNEL_OK")
</pallas_src>

<mosaic_0001>
module attributes {stable_mosaic.version = 11 : i64} {
  func.func @_generator_kernel(%arg0: i32, %arg1: memref<8x28xbf16, #tpu.memory_space<vmem>>, %arg2: memref<8x100xbf16, #tpu.memory_space<vmem>>, %arg3: memref<28x128xbf16, #tpu.memory_space<vmem>>, %arg4: memref<100x128xbf16, #tpu.memory_space<vmem>>, %arg5: memref<1x128xf32, #tpu.memory_space<vmem>>, %arg6: memref<128x256xbf16, #tpu.memory_space<vmem>>, %arg7: memref<1x256xf32, #tpu.memory_space<vmem>>, %arg8: memref<256x128xbf16, #tpu.memory_space<vmem>>, %arg9: memref<1x128xf32, #tpu.memory_space<vmem>>, %arg10: memref<8x128xf32, #tpu.memory_space<vmem>>) attributes {dimension_semantics = [#tpu.dimension_semantics<parallel>], iteration_bounds = array<i64: 1>, scalar_prefetch = 0 : i64, scratch_operands = 0 : i64, tpu.core_type = #tpu.core_type<tc>, window_params = [{transform_indices = @transform_0, window_bounds = array<i64: 8, 28>}, {transform_indices = @transform_1, window_bounds = array<i64: 8, 100>}, {pipeline_mode = #tpu.pipeline_mode<synchronous>, transform_indices = @transform_2, window_bounds = array<i64: 28, 128>}, {pipeline_mode = #tpu.pipeline_mode<synchronous>, transform_indices = @transform_3, window_bounds = array<i64: 100, 128>}, {pipeline_mode = #tpu.pipeline_mode<synchronous>, transform_indices = @transform_4, window_bounds = array<i64: 1, 128>}, {pipeline_mode = #tpu.pipeline_mode<synchronous>, transform_indices = @transform_5, window_bounds = array<i64: 128, 256>}, {pipeline_mode = #tpu.pipeline_mode<synchronous>, transform_indices = @transform_6, window_bounds = array<i64: 1, 256>}, {pipeline_mode = #tpu.pipeline_mode<synchronous>, transform_indices = @transform_7, window_bounds = array<i64: 256, 128>}, {pipeline_mode = #tpu.pipeline_mode<synchronous>, transform_indices = @transform_8, window_bounds = array<i64: 1, 128>}, {transform_indices = @transform_9, window_bounds = array<i64: 8, 128>}]} {
    %c0 = arith.constant 0 : index
    %c0_0 = arith.constant 0 : index
    %0 = vector.load %arg1[%c0, %c0_0] : memref<8x28xbf16, #tpu.memory_space<vmem>>, vector<8x28xbf16>
    %c0_1 = arith.constant 0 : index
    %c0_2 = arith.constant 0 : index
    %1 = vector.load %arg3[%c0_1, %c0_2] : memref<28x128xbf16, #tpu.memory_space<vmem>>, vector<28x128xbf16>
    %cst = arith.constant dense<0.000000e+00> : vector<8x128xf32>
    %2 = tpu.matmul %0, %1, %cst {dimension_numbers = #tpu.dot_dimension_numbers<[1], [0], [0], [1], [0, 0, 1, 1], [], []>} : vector<8x28xbf16>, vector<28x128xbf16>, vector<8x128xf32> -> vector<8x128xf32>
    %c0_3 = arith.constant 0 : index
    %c0_4 = arith.constant 0 : index
    %3 = vector.load %arg2[%c0_3, %c0_4] : memref<8x100xbf16, #tpu.memory_space<vmem>>, vector<8x100xbf16>
    %c0_5 = arith.constant 0 : index
    %c0_6 = arith.constant 0 : index
    %4 = vector.load %arg4[%c0_5, %c0_6] : memref<100x128xbf16, #tpu.memory_space<vmem>>, vector<100x128xbf16>
    %cst_7 = arith.constant dense<0.000000e+00> : vector<8x128xf32>
    %5 = tpu.matmul %3, %4, %cst_7 {dimension_numbers = #tpu.dot_dimension_numbers<[1], [0], [0], [1], [0, 0, 1, 1], [], []>} : vector<8x100xbf16>, vector<100x128xbf16>, vector<8x128xf32> -> vector<8x128xf32>
    %6 = arith.addf %2, %5 : vector<8x128xf32>
    %c0_8 = arith.constant 0 : index
    %c0_9 = arith.constant 0 : index
    %7 = vector.load %arg5[%c0_8, %c0_9] : memref<1x128xf32, #tpu.memory_space<vmem>>, vector<1x128xf32>
    %8 = vector.broadcast %7 : vector<1x128xf32> to vector<8x128xf32>
    %9 = arith.addf %6, %8 : vector<8x128xf32>
    %cst_10 = arith.constant 0.000000e+00 : f32
    %10 = vector.broadcast %cst_10 : f32 to vector<8x128xf32>
    %11 = arith.maximumf %9, %10 : vector<8x128xf32>
    %12 = arith.truncf %11 : vector<8x128xf32> to vector<8x128xbf16>
    %c0_11 = arith.constant 0 : index
    %c0_12 = arith.constant 0 : index
    %13 = vector.load %arg6[%c0_11, %c0_12] : memref<128x256xbf16, #tpu.memory_space<vmem>>, vector<128x256xbf16>
    %cst_13 = arith.constant dense<0.000000e+00> : vector<8x256xf32>
    %14 = tpu.matmul %12, %13, %cst_13 {dimension_numbers = #tpu.dot_dimension_numbers<[1], [0], [0], [1], [0, 0, 1, 1], [], []>} : vector<8x128xbf16>, vector<128x256xbf16>, vector<8x256xf32> -> vector<8x256xf32>
    %c0_14 = arith.constant 0 : index
    %c0_15 = arith.constant 0 : index
    %15 = vector.load %arg7[%c0_14, %c0_15] : memref<1x256xf32, #tpu.memory_space<vmem>>, vector<1x256xf32>
    %16 = vector.broadcast %15 : vector<1x256xf32> to vector<8x256xf32>
    %17 = arith.addf %14, %16 : vector<8x256xf32>
    %cst_16 = arith.constant 0.000000e+00 : f32
    %18 = vector.broadcast %cst_16 : f32 to vector<8x256xf32>
    %19 = arith.maximumf %17, %18 : vector<8x256xf32>
    %20 = arith.truncf %19 : vector<8x256xf32> to vector<8x256xbf16>
    %c0_17 = arith.constant 0 : index
    %c0_18 = arith.constant 0 : index
    %21 = vector.load %arg8[%c0_17, %c0_18] : memref<256x128xbf16, #tpu.memory_space<vmem>>, vector<256x128xbf16>
    %cst_19 = arith.constant dense<0.000000e+00> : vector<8x128xf32>
    %22 = tpu.matmul %20, %21, %cst_19 {dimension_numbers = #tpu.dot_dimension_numbers<[1], [0], [0], [1], [0, 0, 1, 1], [], []>} : vector<8x256xbf16>, vector<256x128xbf16>, vector<8x128xf32> -> vector<8x128xf32>
    %c0_20 = arith.constant 0 : index
    %c0_21 = arith.constant 0 : index
    %23 = vector.load %arg9[%c0_20, %c0_21] : memref<1x128xf32, #tpu.memory_space<vmem>>, vector<1x128xf32>
    %24 = vector.broadcast %23 : vector<1x128xf32> to vector<8x128xf32>
    %25 = arith.addf %22, %24 : vector<8x128xf32>
    %26 = math.tanh %25 : vector<8x128xf32>
    %c0_22 = arith.constant 0 : index
    %c0_23 = arith.constant 0 : index
    %27 = vector.load %arg10[%c0_22, %c0_23] : memref<8x128xf32, #tpu.memory_space<vmem>>, vector<8x128xf32>
    tpu.vector_store %arg10[%c0_22, %c0_23], %26 {strides = array<i32>} : memref<8x128xf32, #tpu.memory_space<vmem>>, vector<8x128xf32>,
    return
  }
  func.func @transform_0(%arg0: i32) -> (i32, i32) {
    %c0_i32 = arith.constant 0 : i32
    %c0_i32_0 = arith.constant 0 : i32
    return %arg0, %c0_i32 : i32, i32
  }
  func.func @transform_1(%arg0: i32) -> (i32, i32) {
    %c0_i32 = arith.constant 0 : i32
    %c0_i32_0 = arith.constant 0 : i32
    return %arg0, %c0_i32 : i32, i32
  }
  func.func @transform_2(%arg0: i32) -> (i32, i32) {
    %c0_i32 = arith.constant 0 : i32
    %c0_i32_0 = arith.constant 0 : i32
    %c0_i32_1 = arith.constant 0 : i32
    return %c0_i32, %c0_i32_0 : i32, i32
  }
  func.func @transform_3(%arg0: i32) -> (i32, i32) {
    %c0_i32 = arith.constant 0 : i32
    %c0_i32_0 = arith.constant 0 : i32
    %c0_i32_1 = arith.constant 0 : i32
    return %c0_i32, %c0_i32_0 : i32, i32
  }
  func.func @transform_4(%arg0: i32) -> (i32, i32) {
    %c0_i32 = arith.constant 0 : i32
    %c0_i32_0 = arith.constant 0 : i32
    %c0_i32_1 = arith.constant 0 : i32
    return %c0_i32, %c0_i32_0 : i32, i32
  }
  func.func @transform_5(%arg0: i32) -> (i32, i32) {
    %c0_i32 = arith.constant 0 : i32
    %c0_i32_0 = arith.constant 0 : i32
    %c0_i32_1 = arith.constant 0 : i32
    return %c0_i32, %c0_i32_0 : i32, i32
  }
  func.func @transform_6(%arg0: i32) -> (i32, i32) {
    %c0_i32 = arith.constant 0 : i32
    %c0_i32_0 = arith.constant 0 : i32
    %c0_i32_1 = arith.constant 0 : i32
    return %c0_i32, %c0_i32_0 : i32, i32
  }
  func.func @transform_7(%arg0: i32) -> (i32, i32) {
    %c0_i32 = arith.constant 0 : i32
    %c0_i32_0 = arith.constant 0 : i32
    %c0_i32_1 = arith.constant 0 : i32
    return %c0_i32, %c0_i32_0 : i32, i32
  }
  func.func @transform_8(%arg0: i32) -> (i32, i32) {
    %c0_i32 = arith.constant 0 : i32
    %c0_i32_0 = arith.constant 0 : i32
    %c0_i32_1 = arith.constant 0 : i32
    return %c0_i32, %c0_i32_0 : i32, i32
  }
  func.func @transform_9(%arg0: i32) -> (i32, i32) {
    %c0_i32 = arith.constant 0 : i32
    %c0_i32_0 = arith.constant 0 : i32
    return %arg0, %c0_i32 : i32, i32
  }
}

</mosaic_0001>

<llo_original>
// kernel: tpu_custom_call.1
$region0: #{tpu_custom_call.1}
  #allocation0 [shape = 'u32[]', space=smem, size = 0x4, offset = 0x4, fixed_abs, tag = 'smem constant byte address 0x4 - core index']
  #allocation1 [shape = 'u32[144,128]{1,0:T(1,128)}', space=vmem, size = 0x12000, scoped, tag = 'internal scratch']
  %s0 = inlined_call_operand.hbm [shape: bf16[8,28], index: 0, kind: input, shape index: {}]
  %s1 = inlined_call_operand.hbm [shape: bf16[8,100], index: 1, kind: input, shape index: {}]
  %s2 = inlined_call_operand.hbm [shape: bf16[28,128], index: 2, kind: input, shape index: {}]
  %s3 = inlined_call_operand.hbm [shape: bf16[100,128], index: 3, kind: input, shape index: {}]
  %s4 = inlined_call_operand.vmem [shape: f32[1,128], index: 4, kind: input, shape index: {}]
  %s5 = inlined_call_operand.hbm [shape: bf16[128,256], index: 5, kind: input, shape index: {}]
  %s6 = inlined_call_operand.vmem [shape: f32[1,256], index: 6, kind: input, shape index: {}]
  %s7 = inlined_call_operand.hbm [shape: bf16[256,128], index: 7, kind: input, shape index: {}]
  %s8 = inlined_call_operand.vmem [shape: f32[1,128], index: 8, kind: input, shape index: {}]
  %s9 = inlined_call_operand.hbm [shape: f32[8,128], index: 9, kind: output, shape index: {}]
  %s10 = sld [smem:[#allocation0]]
  $region70: #{tpu_custom_call.1} parent=0
    _
  %s12 = ssub.s32 1, %s10
  %s13 = scalar_select 0, %s12, %s10
  $region1: #{tpu_custom_call.1} parent=0
    #allocation2 [shape = 'u8[2048]{0}', space=vmem, size = 0x800, scoped, tag = 'input window, operand 0, single buffered']
    #allocation3 [shape = 's32[1]{0}', space=sflag, size = 0x4, scoped, tag = 'scoped memory for tpu_custom_call.1']
    #allocation4 [shape = 's32[1]{0}', space=sflag, size = 0x4, scoped, tag = 'scoped memory for tpu_custom_call.1']
    #allocation5 [shape = 'u8[2048]{0}', space=vmem, size = 0x800, scoped, tag = 'input window, operand 1, single buffered']
    #allocation6 [shape = 's32[1]{0}', space=sflag, size = 0x4, scoped, tag = 'scoped memory for tpu_custom_call.1']
    #allocation7 [shape = 'u8[8192]{0}', space=vmem, size = 0x2000, scoped, tag = 'input window, operand 2, single buffered']
    #allocation8 [shape = 'u8[26624]{0}', space=vmem, size = 0x6800, scoped, tag = 'input window, operand 3, single buffered']
    #allocation9 [shape = 's32[1]{0}', space=sflag, size = 0x4, scoped, tag = 'scoped memory for tpu_custom_call.1']
    #allocation10 [shape = 'u8[65536]{0}', space=vmem, size = 0x10000, scoped, tag = 'input window, operand 5, single buffered']
    #allocation11 [shape = 'u8[65536]{0}', space=vmem, size = 0x10000, scoped, tag = 'input window, operand 7, single buffered']
    #allocation12 [shape = 's32[1]{0}', space=sflag, size = 0x4, scoped, tag = 'scoped memory for tpu_custom_call.1']
    #allocation13 [shape = 'u8[4096]{0}', space=vmem, size = 0x1000, scoped, tag = 'output window, operand 0, single buffered']
    %14 = vsyncpa [#allocation3], 0
    %15 = vsyncpa [#allocation6], 0
    %16 = vsyncpa [#allocation9], 0
    %17 = vsyncpa [#allocation12], 0
    %18 = vsyncpa [#allocation4], 0
    // Predicated region
    $region2: #{tpu_custom_call.1} parent=1 // pred_check
      _
    $region3: #{tpu_custom_call.1} parent=1 // pred_check_branch
      %20 = sbr.rel (0) target = $region5
    $region4: #{tpu_custom_call.1} parent=1 // pred_region
      %s22 = ssub.s32 64, 64
      %23 = vsyncadd [#allocation3], %s22
      %s25 = sshll.u32 [#allocation2], 4
      %s26 = int_to_ptr.vmem [resolvable:$true] %s25
      %28 = dma.hbm_to_vmem [thread:$0]  %s0, 64, %s26, [#allocation3]
    $region5: #{tpu_custom_call.1} parent=1 // pred_fallthru
      _
    // Predicated region
    $region6: #{tpu_custom_call.1} parent=1 // pred_check
      _
    $region7: #{tpu_custom_call.1} parent=1 // pred_check_branch
      %30 = sbr.rel (0) target = $region9
    $region8: #{tpu_custom_call.1} parent=1 // pred_region
      %s32 = ssub.s32 64, 64
      %33 = vsyncadd [#allocation6], %s32
      %s35 = sshll.u32 [#allocation5], 4
      %s36 = int_to_ptr.vmem [resolvable:$true] %s35
      %38 = dma.hbm_to_vmem [thread:$0]  %s1, 64, %s36, [#allocation6]
    $region9: #{tpu_custom_call.1} parent=1 // pred_fallthru
      _
    // Predicated region
    $region10: #{tpu_custom_call.1} parent=1 // pred_check
      _
    $region11: #{tpu_custom_call.1} parent=1 // pred_check_branch
      %40 = sbr.rel (0) target = $region13
    $region12: #{tpu_custom_call.1} parent=1 // pred_region
      %s42 = ssub.s32 256, 256
      %43 = vsyncadd [#allocation6], %s42
      %s44 = sshll.u32 [#allocation7], 4
      %s45 = int_to_ptr.vmem [resolvable:$true] %s44
      %50 = dma.hbm_to_vmem [thread:$0]  %s2, 256, %s45, [#allocation6], 64, 64, 4
    $region13: #{tpu_custom_call.1} parent=1 // pred_fallthru
      _
    // Predicated region
    $region14: #{tpu_custom_call.1} parent=1 // pred_check
      _
    $region15: #{tpu_custom_call.1} parent=1 // pred_check_branch
      %52 = sbr.rel (0) target = $region17
    $region16: #{tpu_custom_call.1} parent=1 // pred_region
      %s54 = ssub.s32 832, 832
      %55 = vsyncadd [#allocation9], %s54
      %s56 = sshll.u32 [#allocation8], 4
      %s57 = int_to_ptr.vmem [resolvable:$true] %s56
      %62 = dma.hbm_to_vmem [thread:$0]  %s3, 832, %s57, [#allocation9], 64, 64, 4
    $region17: #{tpu_custom_call.1} parent=1 // pred_fallthru
      _
    // Predicated region
    $region18: #{tpu_custom_call.1} parent=1 // pred_check
      _
    $region19: #{tpu_custom_call.1} parent=1 // pred_check_branch
      %64 = sbr.rel (0) target = $region21
    $region20: #{tpu_custom_call.1} parent=1 // pred_region
      _
    $region21: #{tpu_custom_call.1} parent=1 // pred_fallthru
      _
    // Predicated region
    $region22: #{tpu_custom_call.1} parent=1 // pred_check
      _
    $region23: #{tpu_custom_call.1} parent=1 // pred_check_branch
      %66 = sbr.rel (0) target = $region25
    $region24: #{tpu_custom_call.1} parent=1 // pred_region
      %s68 = ssub.s32 2048, 2048
      %69 = vsyncadd [#allocation9], %s68
      %s70 = sshll.u32 [#allocation10], 4
      %s71 = int_to_ptr.vmem [resolvable:$true] %s70
      %76 = dma.hbm_to_vmem [thread:$0]  %s5, 2048, %s71, [#allocation9], 128, 128, 8
    $region25: #{tpu_custom_call.1} parent=1 // pred_fallthru
      _
    // Predicated region
    $region26: #{tpu_custom_call.1} parent=1 // pred_check
      _
    $region27: #{tpu_custom_call.1} parent=1 // pred_check_branch
      %78 = sbr.rel (0) target = $region29
    $region28: #{tpu_custom_call.1} parent=1 // pred_region
      _
    $region29: #{tpu_custom_call.1} parent=1 // pred_fallthru
      _
    // Predicated region
    $region30: #{tpu_custom_call.1} parent=1 // pred_check
      _
    $region31: #{tpu_custom_call.1} parent=1 // pred_check_branch
      %80 = sbr.rel (0) target = $region33
    $region32: #{tpu_custom_call.1} parent=1 // pred_region
      %s82 = ssub.s32 2048, 2048
      %83 = vsyncadd [#allocation12], %s82
      %s84 = sshll.u32 [#allocation11], 4
      %s85 = int_to_ptr.vmem [resolvable:$true] %s84
      %90 = dma.hbm_to_vmem [thread:$0]  %s7, 2048, %s85, [#allocation12], 64, 64, 4
    $region33: #{tpu_custom_call.1} parent=1 // pred_fallthru
      _
    // Predicated region
    $region34: #{tpu_custom_call.1} parent=1 // pred_check
      _
    $region35: #{tpu_custom_call.1} parent=1 // pred_check_branch
      %92 = sbr.rel (0) target = $region37
    $region36: #{tpu_custom_call.1} parent=1 // pred_region
      _
    $region37: #{tpu_custom_call.1} parent=1 // pred_fallthru
      _
    // Predicated region
    $region38: #{tpu_custom_call.1} parent=1 // pred_check
      _
    $region39: #{tpu_custom_call.1} parent=1 // pred_check_branch
      %94 = sbr.rel (0) target = $region41
    $region40: #{tpu_custom_call.1} parent=1 // pred_region
      %95 = dma.done [#allocation3], 64
    $region41: #{tpu_custom_call.1} parent=1 // pred_fallthru
      _
    // Predicated region
    $region42: #{tpu_custom_call.1} parent=1 // pred_check
      _
    $region43: #{tpu_custom_call.1} parent=1 // pred_check_branch
      %97 = sbr.rel (0) target = $region45
    $region44: #{tpu_custom_call.1} parent=1 // pred_region
      %98 = dma.done [#allocation6], 64
    $region45: #{tpu_custom_call.1} parent=1 // pred_fallthru
      _
    // Predicated region
    $region46: #{tpu_custom_call.1} parent=1 // pred_check
      _
    $region47: #{tpu_custom_call.1} parent=1 // pred_check_branch
      %100 = sbr.rel (0) target = $region49
    $region48: #{tpu_custom_call.1} parent=1 // pred_region
      %101 = dma.done [#allocation6], 256
    $region49: #{tpu_custom_call.1} parent=1 // pred_fallthru
      _
    // Predicated region
    $region50: #{tpu_custom_call.1} parent=1 // pred_check
      _
    $region51: #{tpu_custom_call.1} parent=1 // pred_check_branch
      %103 = sbr.rel (0) target = $region53
    $region52: #{tpu_custom_call.1} parent=1 // pred_region
      %104 = dma.done [#allocation9], 832
    $region53: #{tpu_custom_call.1} parent=1 // pred_fallthru
      _
    // Predicated region
    $region54: #{tpu_custom_call.1} parent=1 // pred_check
      _
    $region55: #{tpu_custom_call.1} parent=1 // pred_check_branch
      %106 = sbr.rel (0) target = $region57
    $region56: #{tpu_custom_call.1} parent=1 // pred_region
      %107 = dma.done [#allocation9], 2048
    $region57: #{tpu_custom_call.1} parent=1 // pred_fallthru
      _
    // Predicated region
    $region58: #{tpu_custom_call.1} parent=1 // pred_check
      _
    $region59: #{tpu_custom_call.1} parent=1 // pred_check_branch
      %109 = sbr.rel (0) target = $region61
    $region60: #{tpu_custom_call.1} parent=1 // pred_region
      %110 = dma.done [#allocation12], 2048
    $region61: #{tpu_custom_call.1} parent=1 // pred_fallthru
      _
    %v112 = vld [vmem:[#allocation2] sm:$0xf]
    %v113 = vld [vmem:[#allocation7] sm:$0xf]
    %v114 = vld [vmem:[#allocation7 + $0x4] sm:$0xf]
    %v115 = vld [vmem:[#allocation7 + $0x8] sm:$0xf]
    %v116 = vld [vmem:[#allocation7 + $0xc] sm:$0x3]
    %v117 = vld [vmem:[#allocation5] sm:$0xf]
    %v118 = vld [vmem:[#allocation8] sm:$0xf]
    %v119 = vld [vmem:[#allocation8 + $0x4] sm:$0xf]
    %v120 = vld [vmem:[#allocation8 + $0x8] sm:$0xf]
    %v121 = vld [vmem:[#allocation8 + $0xc] sm:$0xf]
    %v122 = vld [vmem:[#allocation8 + $0x10] sm:$0xf]
    %v123 = vld [vmem:[#allocation8 + $0x14] sm:$0xf]
    %v124 = vld [vmem:[#allocation8 + $0x18] sm:$0xf]
    %v125 = vld [vmem:[#allocation8 + $0x1c] sm:$0xf]
    %v126 = vld [vmem:[#allocation8 + $0x20] sm:$0xf]
    %v127 = vld [vmem:[#allocation8 + $0x24] sm:$0xf]
    %v128 = vld [vmem:[#allocation8 + $0x28] sm:$0xf]
    %v129 = vld [vmem:[#allocation8 + $0x2c] sm:$0xf]
    %v130 = vld [vmem:[#allocation8 + $0x30] sm:$0x3]
    %v144 = vunpack.c.l.b16 %v118
    %v145 = vunpack.c.l.b16 %v119
    %v146 = vunpack.c.l.b16 %v120
    %v147 = vunpack.c.l.b16 %v121
    %v148 = vunpack.c.l.b16 %v122
    %v149 = vunpack.c.l.b16 %v123
    %v150 = vunpack.c.l.b16 %v124
    %v151 = vunpack.c.l.b16 %v125
    %v152 = vunpack.c.l.b16 %v126
    %v153 = vunpack.c.l.b16 %v127
    %v154 = vunpack.c.l.b16 %v128
    %v155 = vunpack.c.l.b16 %v129
    %v156 = vunpack.c.l.b16 %v130
    %v157 = vpack.c.b16 %v145, %v144
    %v158 = vpack.c.b16 %v147, %v146
    %v159 = vpack.c.b16 %v149, %v148
    %v160 = vpack.c.b16 %v151, %v150
    %v161 = vpack.c.b16 %v153, %v152
    %v162 = vpack.c.b16 %v155, %v154
    %v163 = vpack.c.b16 %v156, %v156
    %vm170 = vcmask 818176
    %v172 = vsel %vm170, %v117, 0
    %vm174 = vcmask 1041408
    %v176 = vsel %vm174, %v163, 0
    %178 = vmatprep.subr.bf16.mxu0 0
    %179 = vmatpush1.bf16.msra.mxu0 0
    %180 = vmatprep.subr.bf16.mxu0 0
    %181 = vmatpush1.bf16.msra.mxu0 %v176
    %182 = vmatprep.subr.bf16.mxu0 0
    %183 = vmatpush1.bf16.msra.mxu0 %v162
    %184 = vmatprep.subr.bf16.mxu0 0
    %185 = vmatpush1.bf16.msra.mxu0 %v161
    %186 = vmatprep.subr.bf16.mxu0 0
    %187 = vmatpush1.bf16.msra.mxu0 %v160
    %188 = vmatprep.subr.bf16.mxu0 0
    %189 = vmatpush1.bf16.msra.mxu0 %v159
    %190 = vmatprep.subr.bf16.mxu0 0
    %191 = vmatpush1.bf16.msra.mxu0 %v158
    %192 = vmatprep.subr.bf16.mxu0 0
    %193 = vmatpush1.bf16.msra.mxu0 %v157
    %194 = vmatprep.subr.bf16.mxu0 0
    %195 = vmatpush2.bf16.msra.mxu0 0
    %196 = vmatprep.subr.bf16.mxu0 0
    %197 = vmatpush2.bf16.msra.mxu0 0
    %198 = vmatprep.subr.bf16.mxu0 0
    %199 = vmatpush2.bf16.msra.mxu0 0
    %200 = vmatprep.subr.bf16.mxu0 0
    %201 = vmatpush2.bf16.msra.mxu0 0
    %202 = vmatprep.subr.bf16.mxu0 0
    %203 = vmatpush2.bf16.msra.mxu0 0
    %204 = vmatprep.subr.bf16.mxu0 0
    %205 = vmatpush2.bf16.msra.mxu0 0
    %206 = vmatprep.subr.bf16.mxu0 0
    %207 = vmatpush2.bf16.msra.mxu0 0
    %208 = vmatprep.subr.bf16.mxu0 0
    %209 = vmatpush2.bf16.msra.mxu0 0
    %210 = vmatprep.mubr.bf16.mxu0 0
    %211 = vmatmul.mubr.bf16.gmra.mxu0 %v172
    %v212 = vpop.f32.mrf.mxu0
    %v213 = vadd.f32 0.0, %v212
    %v214 = vpop.f32.mrf.mxu0
    %v215 = vpop.f32.mrf.mxu0
    %v216 = vpop.f32.mrf.mxu0
    %217 = vdwg.mxu0
    %v222 = vunpack.c.l.b16 %v113
    %v223 = vunpack.c.l.b16 %v114
    %v224 = vunpack.c.l.b16 %v115
    %v225 = vunpack.c.l.b16 %v116
    %v226 = vpack.c.b16 %v223, %v222
    %v227 = vpack.c.b16 %v225, %v224
    %vm229 = vcmask 228352
    %v231 = vsel %vm229, %v112, 0
    %vm233 = vcmask 1045504
    %v235 = vsel %vm233, %v227, 0
    %237 = vmatprep.subr.bf16.mxu0 0
    %238 = vmatpush1.bf16.msra.mxu0 0
    %239 = vmatprep.subr.bf16.mxu0 0
    %240 = vmatpush1.bf16.msra.mxu0 0
    %241 = vmatprep.subr.bf16.mxu0 0
    %242 = vmatpush1.bf16.msra.mxu0 0
    %243 = vmatprep.subr.bf16.mxu0 0
    %244 = vmatpush1.bf16.msra.mxu0 0
    %245 = vmatprep.subr.bf16.mxu0 0
    %246 = vmatpush1.bf16.msra.mxu0 0
    %247 = vmatprep.subr.bf16.mxu0 0
    %248 = vmatpush1.bf16.msra.mxu0 0
    %249 = vmatprep.subr.bf16.mxu0 0
    %250 = vmatpush1.bf16.msra.mxu0 %v235
    %251 = vmatprep.subr.bf16.mxu0 0
    %252 = vmatpush1.bf16.msra.mxu0 %v226
    %253 = vmatprep.subr.bf16.mxu0 0
    %254 = vmatpush2.bf16.msra.mxu0 0
    %255 = vmatprep.subr.bf16.mxu0 0
    %256 = vmatpush2.bf16.msra.mxu0 0
    %257 = vmatprep.subr.bf16.mxu0 0
    %258 = vmatpush2.bf16.msra.mxu0 0
    %259 = vmatprep.subr.bf16.mxu0 0
    %260 = vmatpush2.bf16.msra.mxu0 0
    %261 = vmatprep.subr.bf16.mxu0 0
    %262 = vmatpush2.bf16.msra.mxu0 0
    %263 = vmatprep.subr.bf16.mxu0 0
    %264 = vmatpush2.bf16.msra.mxu0 0
    %265 = vmatprep.subr.bf16.mxu0 0
    %266 = vmatpush2.bf16.msra.mxu0 0
    %267 = vmatprep.subr.bf16.mxu0 0
    %268 = vmatpush2.bf16.msra.mxu0 0
    %269 = vmatprep.mubr.bf16.mxu0 0
    %270 = vmatmul.mubr.bf16.gmra.mxu0 %v231
    %v271 = vpop.f32.mrf.mxu0
    %v272 = vadd.f32 %v213, %v271
    %v273 = vpop.f32.mrf.mxu0
    %v274 = vpop.f32.mrf.mxu0
    %v275 = vpop.f32.mrf.mxu0
    %276 = vdwg.mxu0
    %v277 = vld [vmem:[%s4] sm:$0x1]
    %v279 = vlaneseq
    %v280 = vshrl.u32 %v279, 7
    %v281 = vsub.s32 0, %v280
    %v282 = vrot.slane %v277, %v281
    %v284 = vadd.f32 %v272, %v282
    %v285 = vmax.f32 %v284, 0.0
    %v286 = vpack.c.bf16 %v285, %v285
    %v287 = vld [vmem:[#allocation10] sm:$0xff]
    %v288 = vld [vmem:[#allocation10 + $0x8] sm:$0xff]
    %v289 = vld [vmem:[#allocation10 + $0x10] sm:$0xff]
    %v290 = vld [vmem:[#allocation10 + $0x18] sm:$0xff]
    %v291 = vld [vmem:[#allocation10 + $0x20] sm:$0xff]
    %v292 = vld [vmem:[#allocation10 + $0x28] sm:$0xff]
    %v293 = vld [vmem:[#allocation10 + $0x30] sm:$0xff]
    %v294 = vld [vmem:[#allocation10 + $0x38] sm:$0xff]
    %v295 = vld [vmem:[#allocation10 + $0x40] sm:$0xff]
    %v296 = vld [vmem:[#allocation10 + $0x48] sm:$0xff]
    %v297 = vld [vmem:[#allocation10 + $0x50] sm:$0xff]
    %v298 = vld [vmem:[#allocation10 + $0x58] sm:$0xff]
    %v299 = vld [vmem:[#allocation10 + $0x60] sm:$0xff]
    %v300 = vld [vmem:[#allocation10 + $0x68] sm:$0xff]
    %v301 = vld [vmem:[#allocation10 + $0x70] sm:$0xff]
    %v302 = vld [vmem:[#allocation10 + $0x78] sm:$0xff]
    %v303 = vld [vmem:[%s6] sm:$0x3]
    %v305 = vlaneseq
    %v306 = vshrl.u32 %v305, 7
    %v307 = vsub.s32 0, %v306
    %v308 = vrot.slane %v303, %v307
    %v309 = vlaneseq
    %v310 = vshrl.u32 %v309, 7
    %v311 = vsub.s32 1, %v310
    %v312 = vrot.slane %v303, %v311
    %v331 = vunpack.c.l.b16 %v287
    %v332 = vunpack.c.h.b16 %v287
    %v333 = vunpack.c.l.b16 %v288
    %v334 = vunpack.c.h.b16 %v288
    %v335 = vunpack.c.l.b16 %v289
    %v336 = vunpack.c.h.b16 %v289
    %v337 = vunpack.c.l.b16 %v290
    %v338 = vunpack.c.h.b16 %v290
    %v339 = vunpack.c.l.b16 %v291
    %v340 = vunpack.c.h.b16 %v291
    %v341 = vunpack.c.l.b16 %v292
    %v342 = vunpack.c.h.b16 %v292
    %v343 = vunpack.c.l.b16 %v293
    %v344 = vunpack.c.h.b16 %v293
    %v345 = vunpack.c.l.b16 %v294
    %v346 = vunpack.c.h.b16 %v294
    %v347 = vunpack.c.l.b16 %v295
    %v348 = vunpack.c.h.b16 %v295
    %v349 = vunpack.c.l.b16 %v296
    %v350 = vunpack.c.h.b16 %v296
    %v351 = vunpack.c.l.b16 %v297
    %v352 = vunpack.c.h.b16 %v297
    %v353 = vunpack.c.l.b16 %v298
    %v354 = vunpack.c.h.b16 %v298
    %v355 = vunpack.c.l.b16 %v299
    %v356 = vunpack.c.h.b16 %v299
    %v357 = vunpack.c.l.b16 %v300
    %v358 = vunpack.c.h.b16 %v300
    %v359 = vunpack.c.l.b16 %v301
    %v360 = vunpack.c.h.b16 %v301
    %v361 = vunpack.c.l.b16 %v302
    %v362 = vunpack.c.h.b16 %v302
    %v363 = vpack.c.b16 %v333, %v331
    %v364 = vpack.c.b16 %v334, %v332
    %v365 = vpack.c.b16 %v337, %v335
    %v366 = vpack.c.b16 %v338, %v336
    %v367 = vpack.c.b16 %v341, %v339
    %v368 = vpack.c.b16 %v342, %v340
    %v369 = vpack.c.b16 %v345, %v343
    %v370 = vpack.c.b16 %v346, %v344
    %v371 = vpack.c.b16 %v349, %v347
    %v372 = vpack.c.b16 %v350, %v348
    %v373 = vpack.c.b16 %v353, %v351
    %v374 = vpack.c.b16 %v354, %v352
    %v375 = vpack.c.b16 %v357, %v355
    %v376 = vpack.c.b16 %v358, %v356
    %v377 = vpack.c.b16 %v361, %v359
    %v378 = vpack.c.b16 %v362, %v360
    %395 = vmatprep.subr.bf16.mxu0 %v378
    %396 = vmatpush1.bf16.msra.mxu0 %v377
    %397 = vmatprep.subr.bf16.mxu0 %v376
    %398 = vmatpush1.bf16.msra.mxu0 %v375
    %399 = vmatprep.subr.bf16.mxu0 %v374
    %400 = vmatpush1.bf16.msra.mxu0 %v373
    %401 = vmatprep.subr.bf16.mxu0 %v372
    %402 = vmatpush1.bf16.msra.mxu0 %v371
    %403 = vmatprep.subr.bf16.mxu0 %v370
    %404 = vmatpush1.bf16.msra.mxu0 %v369
    %405 = vmatprep.subr.bf16.mxu0 %v368
    %406 = vmatpush1.bf16.msra.mxu0 %v367
    %407 = vmatprep.subr.bf16.mxu0 %v366
    %408 = vmatpush1.bf16.msra.mxu0 %v365
    %409 = vmatprep.subr.bf16.mxu0 %v364
    %410 = vmatpush1.bf16.msra.mxu0 %v363
    %411 = vmatprep.subr.bf16.mxu0 0
    %412 = vmatpush2.bf16.msra.mxu0 0
    %413 = vmatprep.subr.bf16.mxu0 0
    %414 = vmatpush2.bf16.msra.mxu0 0
    %415 = vmatprep.subr.bf16.mxu0 0
    %416 = vmatpush2.bf16.msra.mxu0 0
    %417 = vmatprep.subr.bf16.mxu0 0
    %418 = vmatpush2.bf16.msra.mxu0 0
    %419 = vmatprep.subr.bf16.mxu0 0
    %420 = vmatpush2.bf16.msra.mxu0 0
    %421 = vmatprep.subr.bf16.mxu0 0
    %422 = vmatpush2.bf16.msra.mxu0 0
    %423 = vmatprep.subr.bf16.mxu0 0
    %424 = vmatpush2.bf16.msra.mxu0 0
    %425 = vmatprep.subr.bf16.mxu0 0
    %426 = vmatpush2.bf16.msra.mxu0 0
    %427 = vmatprep.mubr.bf16.mxu0 0
    %428 = vmatmul.mubr.bf16.gmra.mxu0 %v286
    %v429 = vpop.f32.mrf.mxu0
    %v430 = vadd.f32 %v308, %v429
    %v431 = vpop.f32.mrf.mxu0
    %v432 = vadd.f32 %v312, %v431
    %v433 = vpop.f32.mrf.mxu0
    %v434 = vpop.f32.mrf.mxu0
    %435 = vdwg.mxu0
    %v436 = vmax.f32 %v430, 0.0
    %v437 = vmax.f32 %v432, 0.0
    %v438 = vpack.c.bf16 %v436, %v436
    %v439 = vpack.c.bf16 %v437, %v437
    %v440 = vld [vmem:[#allocation11] sm:$0xf]
    %v441 = vld [vmem:[#allocation11 + $0x4] sm:$0xf]
    %v442 = vld [vmem:[#allocation11 + $0x8] sm:$0xf]
    %v443 = vld [vmem:[#allocation11 + $0xc] sm:$0xf]
    %v444 = vld [vmem:[#allocation11 + $0x10] sm:$0xf]
    %v445 = vld [vmem:[#allocation11 + $0x14] sm:$0xf]
    %v446 = vld [vmem:[#allocation11 + $0x18] sm:$0xf]
    %v447 = vld [vmem:[#allocation11 + $0x1c] sm:$0xf]
    %v448 = vld [vmem:[#allocation11 + $0x20] sm:$0xf]
    %v449 = vld [vmem:[#allocation11 + $0x24] sm:$0xf]
    %v450 = vld [vmem:[#allocation11 + $0x28] sm:$0xf]
    %v451 = vld [vmem:[#allocation11 + $0x2c] sm:$0xf]
    %v452 = vld [vmem:[#allocation11 + $0x30] sm:$0xf]
    %v453 = vld [vmem:[#allocation11 + $0x34] sm:$0xf]
    %v454 = vld [vmem:[#allocation11 + $0x38] sm:$0xf]
    %v455 = vld [vmem:[#allocation11 + $0x3c] sm:$0xf]
    %v456 = vld [vmem:[#allocation11 + $0x40] sm:$0xf]
    %v457 = vld [vmem:[#allocation11 + $0x44] sm:$0xf]
    %v458 = vld [vmem:[#allocation11 + $0x48] sm:$0xf]
    %v459 = vld [vmem:[#allocation11 + $0x4c] sm:$0xf]
    %v460 = vld [vmem:[#allocation11 + $0x50] sm:$0xf]
    %v461 = vld [vmem:[#allocation11 + $0x54] sm:$0xf]
    %v462 = vld [vmem:[#allocation11 + $0x58] sm:$0xf]
    %v463 = vld [vmem:[#allocation11 + $0x5c] sm:$0xf]
    %v464 = vld [vmem:[#allocation11 + $0x60] sm:$0xf]
    %v465 = vld [vmem:[#allocation11 + $0x64] sm:$0xf]
    %v466 = vld [vmem:[#allocation11 + $0x68] sm:$0xf]
    %v467 = vld [vmem:[#allocation11 + $0x6c] sm:$0xf]
    %v468 = vld [vmem:[#allocation11 + $0x70] sm:$0xf]
    %v469 = vld [vmem:[#allocation11 + $0x74] sm:$0xf]
    %v470 = vld [vmem:[#allocation11 + $0x78] sm:$0xf]
    %v471 = vld [vmem:[#allocation11 + $0x7c] sm:$0xf]
    %v472 = vld [vmem:[%s8] sm:$0x1]
    %v474 = vlaneseq
    %v475 = vshrl.u32 %v474, 7
    %v476 = vsub.s32 0, %v475
    %v477 = vrot.slane %v472, %v476
    %v511 = vunpack.c.l.b16 %v440
    %v512 = vunpack.c.l.b16 %v441
    %v513 = vunpack.c.l.b16 %v442
    %v514 = vunpack.c.l.b16 %v443
    %v515 = vunpack.c.l.b16 %v444
    %v516 = vunpack.c.l.b16 %v445
    %v517 = vunpack.c.l.b16 %v446
    %v518 = vunpack.c.l.b16 %v447
    %v519 = vunpack.c.l.b16 %v448
    %v520 = vunpack.c.l.b16 %v449
    %v521 = vunpack.c.l.b16 %v450
    %v522 = vunpack.c.l.b16 %v451
    %v523 = vunpack.c.l.b16 %v452
    %v524 = vunpack.c.l.b16 %v453
    %v525 = vunpack.c.l.b16 %v454
    %v526 = vunpack.c.l.b16 %v455
    %v527 = vunpack.c.l.b16 %v456
    %v528 = vunpack.c.l.b16 %v457
    %v529 = vunpack.c.l.b16 %v458
    %v530 = vunpack.c.l.b16 %v459
    %v531 = vunpack.c.l.b16 %v460
    %v532 = vunpack.c.l.b16 %v461
    %v533 = vunpack.c.l.b16 %v462
    %v534 = vunpack.c.l.b16 %v463
    %v535 = vunpack.c.l.b16 %v464
    %v536 = vunpack.c.l.b16 %v465
    %v537 = vunpack.c.l.b16 %v466
    %v538 = vunpack.c.l.b16 %v467
    %v539 = vunpack.c.l.b16 %v468
    %v540 = vunpack.c.l.b16 %v469
    %v541 = vunpack.c.l.b16 %v470
    %v542 = vunpack.c.l.b16 %v471
    %v543 = vpack.c.b16 %v512, %v511
    %v544 = vpack.c.b16 %v514, %v513
    %v545 = vpack.c.b16 %v516, %v515
    %v546 = vpack.c.b16 %v518, %v517
    %v547 = vpack.c.b16 %v520, %v519
    %v548 = vpack.c.b16 %v522, %v521
    %v549 = vpack.c.b16 %v524, %v523
    %v550 = vpack.c.b16 %v526, %v525
    %v551 = vpack.c.b16 %v528, %v527
    %v552 = vpack.c.b16 %v530, %v529
    %v553 = vpack.c.b16 %v532, %v531
    %v554 = vpack.c.b16 %v534, %v533
    %v555 = vpack.c.b16 %v536, %v535
    %v556 = vpack.c.b16 %v538, %v537
    %v557 = vpack.c.b16 %v540, %v539
    %v558 = vpack.c.b16 %v542, %v541
    %575 = vmatprep.subr.bf16.mxu0 0
    %576 = vmatpush1.bf16.msra.mxu0 %v550
    %577 = vmatprep.subr.bf16.mxu0 0
    %578 = vmatpush1.bf16.msra.mxu0 %v549
    %579 = vmatprep.subr.bf16.mxu0 0
    %580 = vmatpush1.bf16.msra.mxu0 %v548
    %581 = vmatprep.subr.bf16.mxu0 0
    %582 = vmatpush1.bf16.msra.mxu0 %v547
    %583 = vmatprep.subr.bf16.mxu0 0
    %584 = vmatpush1.bf16.msra.mxu0 %v546
    %585 = vmatprep.subr.bf16.mxu0 0
    %586 = vmatpush1.bf16.msra.mxu0 %v545
    %587 = vmatprep.subr.bf16.mxu0 0
    %588 = vmatpush1.bf16.msra.mxu0 %v544
    %589 = vmatprep.subr.bf16.mxu0 0
    %590 = vmatpush1.bf16.msra.mxu0 %v543
    %591 = vmatprep.subr.bf16.mxu0 0
    %592 = vmatpush2.bf16.msra.mxu0 %v558
    %593 = vmatprep.subr.bf16.mxu0 0
    %594 = vmatpush2.bf16.msra.mxu0 %v557
    %595 = vmatprep.subr.bf16.mxu0 0
    %596 = vmatpush2.bf16.msra.mxu0 %v556
    %597 = vmatprep.subr.bf16.mxu0 0
    %598 = vmatpush2.bf16.msra.mxu0 %v555
    %599 = vmatprep.subr.bf16.mxu0 0
    %600 = vmatpush2.bf16.msra.mxu0 %v554
    %601 = vmatprep.subr.bf16.mxu0 0
    %602 = vmatpush2.bf16.msra.mxu0 %v553
    %603 = vmatprep.subr.bf16.mxu0 0
    %604 = vmatpush2.bf16.msra.mxu0 %v552
    %605 = vmatprep.subr.bf16.mxu0 0
    %606 = vmatpush2.bf16.msra.mxu0 %v551
    %607 = vmatprep.mubr.bf16.mxu0 %v439
    %608 = vmatmul.mubr.bf16.gmra.mxu0 %v438
    %v609 = vpop.f32.mrf.mxu0
    %v610 = vadd.f32 %v477, %v609
    %v611 = vpop.f32.mrf.mxu0
    %v612 = vpop.f32.mrf.mxu0
    %v613 = vpop.f32.mrf.mxu0
    %614 = vdwg.mxu0
    %v615 = vtanh.pop %v610
    %616 = vst [vmem:[#allocation13] sm:$0xff] %v615
    // Predicated region
    $region62: #{tpu_custom_call.1} parent=1 // pred_check
      _
    $region63: #{tpu_custom_call.1} parent=1 // pred_check_branch
      %618 = sbr.rel (0) target = $region65
    $region64: #{tpu_custom_call.1} parent=1 // pred_region
      %s620 = ssub.s32 128, 128
      %621 = vsyncadd [#allocation4], %s620
      %s623 = sshll.u32 [#allocation13], 4
      %s624 = int_to_ptr.vmem [resolvable:$true] %s623
      %626 = dma.vmem_to_hbm [thread:$0]  %s624, 128, %s9, [#allocation4]
    $region65: #{tpu_custom_call.1} parent=1 // pred_fallthru
      _
    // Predicated region
    $region66: #{tpu_custom_call.1} parent=1 // pred_check
      _
    $region67: #{tpu_custom_call.1} parent=1 // pred_check_branch
      %628 = sbr.rel (0) target = $region69
    $region68: #{tpu_custom_call.1} parent=1 // pred_region
      %629 = dma.done [#allocation4], 128
    $region69: #{tpu_custom_call.1} parent=1 // pred_fallthru
      _
    %630 = vsyncpa [#allocation3], 1
    %631 = vsyncpa [#allocation6], 1
    %632 = vsyncpa [#allocation9], 1
    %633 = vsyncpa [#allocation12], 1
    %634 = vsyncpa [#allocation4], 1

</llo_original>
